<compile_context>
chip_gen: v7x
topology: tpu7x:2x2x1
jax: 0.10.0
libtpu: 0.0.40
codegen_flags: <defaults>
</compile_context>

<pallas_src>
import functools
import math

import jax
import jax.numpy as jnp
from jax.experimental import pallas as pl
from jax.experimental.pallas import tpu as pltpu


def _round_up(x, m):
    return ((x + m - 1) // m) * m


def _device_budgets():
    """(W-block byte target, vmem_limit_bytes), derived from the TPU generation."""
    try:
        vmem = int(pltpu.get_tpu_info().vmem_capacity_bytes)
    except Exception:
        vmem = 128 * 1024 * 1024
    if vmem <= 64 * 1024 * 1024:                       # v7x-class (64 MiB VMEM)
        return 4 * 1024 * 1024, 28 * 1024 * 1024
    return 8 * 1024 * 1024, 64 * 1024 * 1024           # v5e / v6e (128 MiB VMEM)


def _pick_it(D, itemsize, target_bytes):
    """Largest i-tile It such that It | D, the (D, It*D) W block is lane-aligned
    (It*D % 128 == 0, or It == D), and the block stays under target_bytes."""
    valid = [c for c in range(1, D + 1)
             if D % c == 0 and ((c * D) % 128 == 0 or c == D)]
    fitting = [c for c in valid if c * D * D * itemsize <= target_bytes]
    return max(fitting) if fitting else min(valid)


def prepare_w(W, mxu_dtype=jnp.bfloat16):
    """Persistent W layout: W2[j, i*D + k] = W[i, j, k], cast to the MXU dtype.

    Call ONCE (e.g. at parameter-init time) so no D^3 cast/copy happens per
    forward call and the dominant HBM stream is already in bf16.
    """
    D = W.shape[0]
    return jnp.transpose(W, (1, 0, 2)).reshape(D, D * D).astype(mxu_dtype)


def tucker_kernel(r_ref, q_ref, p_ref, w_ref, out_ref, acc_ref, *, it, d):
    """One (batch-tile b, i-tile n) grid step.

    r_ref : [TB, D]       (MXU dtype)  -- matmul LHS
    q_ref : [TB, D]       (f32)
    p_ref : [1, TB, It]   (f32)        -- p columns for this i-tile
    w_ref : [D, It*D]     (MXU dtype)  -- W2[:, n*It*D : (n+1)*It*D]
    out   : [TB, 1]       (f32)
    acc   : [TB, 1]       (f32) VMEM scratch, resident across the i-tile axis
    """
    n = pl.program_id(1)

    @pl.when(n == 0)
    def _init():
        acc_ref[...] = jnp.zeros_like(acc_ref)

    # Single wide MXU matmul per step: [TB, D] @ [D, It*D] -> [TB, It*D], f32 acc.
    rw = jnp.dot(r_ref[...], w_ref[...], preferred_element_type=jnp.float32)

    q = q_ref[...]                     # [TB, D]  f32
    p_tile = p_ref[0]                  # [TB, It] f32

    # Fold p directly into the q-weighted lane reduction; no [TB, D] running
    # accumulator, only a [TB, 1] partial.  Static, lane-aligned slices of rw.
    total = jnp.zeros(acc_ref.shape, jnp.float32)          # [TB, 1]
    for ii in range(it):                                    # static unroll
        chunk = rw[:, ii * d:(ii + 1) * d]                  # [TB, D]
        total = total + p_tile[:, ii:ii + 1] * jnp.sum(
            chunk * q, axis=-1, keepdims=True)
    acc_ref[...] += total

    @pl.when(n == pl.num_programs(1) - 1)
    def _finalize():
        out_ref[...] = acc_ref[...].astype(out_ref.dtype)


def tucker_forward(ps, qs, rs, params, reg, *, w2=None, it=None, tb=None,
                   mxu_dtype=jnp.bfloat16):
    P, Q, R, W = params["P"], params["Q"], params["R"], params["W"]
    D = P.shape[1]

    # --- embedding gathers (plain JAX) ---
    p = jnp.take(P, ps, axis=0)          # [B, D]
    q = jnp.take(Q, qs, axis=0)          # [B, D]
    r = jnp.take(R, rs, axis=0)          # [B, D]
    B = p.shape[0]

    # --- regularizer: tiny O(B*D) reduction on the unpadded embeddings ---
    regs = reg * (jnp.sqrt(jnp.sum(p * p))
                  + jnp.sqrt(jnp.sum(q * q))
                  + jnp.sqrt(jnp.sum(r * r)))

    # --- persistent W layout (prefer passing a pre-prepared w2) ---
    if w2 is None:
        w2 = prepare_w(W, mxu_dtype)     # fallback; prepare once for best perf
    itemsize = jnp.dtype(w2.dtype).itemsize

    w_target, vmem_limit = _device_budgets()

    # --- tile sizes ---
    # Larger batch tiles cut W re-streaming (W is re-DMA'd once per batch tile),
    # but keep >= 2 "parallel" tiles when the batch allows it (v7x megacore).
    if tb is None:
        if B >= 1024:
            tb = 512
        elif B >= 512:
            tb = 256
        else:
            tb = _round_up(B, 8)
    B_pad = _round_up(B, tb)
    nb = B_pad // tb

    if it is None:
        it = _pick_it(D, itemsize, w_target)
    assert (D % it == 0) and ((it * D) % 128 == 0 or it == D), "invalid i-tile"
    ni = D // it

    pad_rows = B_pad - B
    if pad_rows:
        p = jnp.pad(p, ((0, pad_rows), (0, 0)))
        q = jnp.pad(q, ((0, pad_rows), (0, 0)))
        r = jnp.pad(r, ((0, pad_rows), (0, 0)))

    # p per i-tile: p_r[n, b, ii] = p[b, n*it + ii]  (tiny O(B*D) copy; avoids
    # any dynamic lane-offset slicing in-kernel — p is only a scalar weight).
    p_r = p.reshape(B_pad, ni, it).transpose(1, 0, 2)   # [ni, B_pad, It]
    r_m = r.astype(mxu_dtype)                           # MXU LHS

    kernel = functools.partial(tucker_kernel, it=it, d=D)
    out = pl.pallas_call(
        kernel,
        out_shape=jax.ShapeDtypeStruct((B_pad, 1), jnp.float32),
        grid_spec=pltpu.PrefetchScalarGridSpec(
            num_scalar_prefetch=0,
            grid=(nb, ni),
            in_specs=[
                pl.BlockSpec((tb, D), lambda b, n: (b, 0)),          # r
                pl.BlockSpec((tb, D), lambda b, n: (b, 0)),          # q
                pl.BlockSpec((1, tb, it), lambda b, n: (n, b, 0)),   # p columns
                pl.BlockSpec((D, it * D), lambda b, n: (0, n)),      # W2 stream
            ],
            out_specs=pl.BlockSpec((tb, 1), lambda b, n: (b, 0)),
            scratch_shapes=[pltpu.VMEM((tb, 1), jnp.float32)],
        ),
        compiler_params=pltpu.CompilerParams(
            dimension_semantics=("parallel", "arbitrary"),
            vmem_limit_bytes=vmem_limit,
        ),
    )(r_m, q, p_r, w2)

    return out[:B], regs


def init_params(key, num_ps, num_qs, num_rs, embedding_dim):
    kP, kQ, kR, kW = jax.random.split(key, 4)
    D = embedding_dim
    # nn.Embedding default init: N(0, 1)
    P = jax.random.normal(kP, (num_ps, D), dtype=jnp.float32)
    Q = jax.random.normal(kQ, (num_qs, D), dtype=jnp.float32)
    R = jax.random.normal(kR, (num_rs, D), dtype=jnp.float32)
    # xavier_uniform_ on (D, D, D): fan_in = fan_out = D*D -> bound = sqrt(3)/D
    bound = math.sqrt(6.0 / (2.0 * D * D))
    W = jax.random.uniform(kW, (D, D, D), dtype=jnp.float32,
                           minval=-bound, maxval=bound)
    return {"P": P, "Q": Q, "R": R, "W": W}


def reference_forward(ps, qs, rs, params, reg):
    p = jnp.take(params["P"], ps, axis=0)
    q = jnp.take(params["Q"], qs, axis=0)
    r = jnp.take(params["R"], rs, axis=0)
    inf = jnp.einsum("bi,ijk,bj,bk->b", p, params["W"], r, q,
                     precision=jax.lax.Precision.HIGHEST)[:, None]
    regs = reg * (jnp.linalg.norm(p) + jnp.linalg.norm(q) + jnp.linalg.norm(r))
    return inf, regs


if __name__ == "__main__":
    num_ps, num_qs, num_rs = 10, 12, 14
    embedding_dim = 32
    reg = 0.01
    batch = 8

    key = jax.random.PRNGKey(0)
    kparam, kp, kq, kr = jax.random.split(key, 4)
    params = init_params(kparam, num_ps, num_qs, num_rs, embedding_dim)

    ps = jax.random.randint(kp, (batch,), 0, num_ps, dtype=jnp.int32)
    qs = jax.random.randint(kq, (batch,), 0, num_qs, dtype=jnp.int32)
    rs = jax.random.randint(kr, (batch,), 0, num_rs, dtype=jnp.int32)

    ref_inf, ref_regs = reference_forward(ps, qs, rs, params, reg)

    # --- f32 MXU path (faithful to the torch module's float32 forward) ---
    # it=8 exercises multi-step W streaming / accumulation (ni = 4).
    w2_f32 = prepare_w(params["W"], jnp.float32)
    inf_f32, regs_f32 = tucker_forward(ps, qs, rs, params, reg, w2=w2_f32,
                                       it=8, mxu_dtype=jnp.float32)
    jax.block_until_ready((inf_f32, regs_f32))
    assert inf_f32.shape == (batch, 1)
    assert jnp.allclose(inf_f32, ref_inf, atol=1e-3, rtol=1e-4)
    assert jnp.allclose(regs_f32, ref_regs, atol=1e-5, rtol=1e-5)

    # --- default bf16 MXU path (W prepared once / persistently; f32 accum) ---
    # Intentionally diverges from exact f32 torch forward; checked against a
    # reference evaluated on identically-cast operands.
    w2_bf16 = prepare_w(params["W"], jnp.bfloat16)
    inf_bf16, regs_bf16 = tucker_forward(ps, qs, rs, params, reg, w2=w2_bf16)
    jax.block_until_ready((inf_bf16, regs_bf16))

    params_cast = dict(
        params,
        R=params["R"].astype(jnp.bfloat16).astype(jnp.float32),
        W=params["W"].astype(jnp.bfloat16).astype(jnp.float32),
    )
    ref_inf_cast, _ = reference_forward(ps, qs, rs, params_cast, reg)
    assert inf_bf16.shape == (batch, 1)
    assert jnp.allclose(inf_bf16, ref_inf_cast, atol=1e-2, rtol=1e-3)
    assert jnp.allclose(regs_bf16, ref_regs, atol=1e-5, rtol=1e-5)

    print("KERNEL_OK")
</pallas_src>

<mosaic_0001>
module attributes {stable_mosaic.version = 11 : i64} {
  func.func @tucker_kernel(%arg0: i32, %arg1: i32, %arg2: memref<8x32xf32, #tpu.memory_space<vmem>>, %arg3: memref<8x32xf32, #tpu.memory_space<vmem>>, %arg4: memref<1x8x8xf32, #tpu.memory_space<vmem>>, %arg5: memref<32x256xf32, #tpu.memory_space<vmem>>, %arg6: memref<8x1xf32, #tpu.memory_space<vmem>>, %arg7: memref<8x1xf32, #tpu.memory_space<vmem>>) attributes {dimension_semantics = [#tpu.dimension_semantics<parallel>, #tpu.dimension_semantics<arbitrary>], iteration_bounds = array<i64: 1, 4>, scalar_prefetch = 0 : i64, scratch_operands = 1 : i64, tpu.core_type = #tpu.core_type<tc>, window_params = [{transform_indices = @transform_0, window_bounds = array<i64: 8, 32>}, {transform_indices = @transform_1, window_bounds = array<i64: 8, 32>}, {transform_indices = @transform_2, window_bounds = array<i64: 1, 8, 8>}, {transform_indices = @transform_3, window_bounds = array<i64: 32, 256>}, {transform_indices = @transform_4, window_bounds = array<i64: 8, 1>}]} {
    %c0_i32 = arith.constant 0 : i32
    %0 = arith.cmpi eq, %arg1, %c0_i32 : i32
    %1 = arith.extui %0 : i1 to i32
    %c0_i32_0 = arith.constant 0 : i32
    %2 = arith.cmpi ne, %1, %c0_i32_0 : i32
    scf.if %2 {
      %cst_23 = arith.constant 0.000000e+00 : f32
      %72 = vector.broadcast %cst_23 : f32 to vector<8x1xf32>
      %c0_24 = arith.constant 0 : index
      %c0_25 = arith.constant 0 : index
      %73 = vector.load %arg7[%c0_24, %c0_25] : memref<8x1xf32, #tpu.memory_space<vmem>>, vector<8x1xf32>
      tpu.vector_store %arg7[%c0_24, %c0_25], %72 {strides = array<i32>} : memref<8x1xf32, #tpu.memory_space<vmem>>, vector<8x1xf32>,
    } else {
    }
    %c0 = arith.constant 0 : index
    %c0_1 = arith.constant 0 : index
    %3 = vector.load %arg2[%c0, %c0_1] : memref<8x32xf32, #tpu.memory_space<vmem>>, vector<8x32xf32>
    %c0_2 = arith.constant 0 : index
    %c0_3 = arith.constant 0 : index
    %4 = vector.load %arg5[%c0_2, %c0_3] : memref<32x256xf32, #tpu.memory_space<vmem>>, vector<32x256xf32>
    %cst = arith.constant dense<0.000000e+00> : vector<8x256xf32>
    %5 = tpu.matmul %3, %4, %cst {dimension_numbers = #tpu.dot_dimension_numbers<[1], [0], [0], [1], [0, 0, 1, 1], [], []>} : vector<8x32xf32>, vector<32x256xf32>, vector<8x256xf32> -> vector<8x256xf32>
    %c0_4 = arith.constant 0 : index
    %c0_5 = arith.constant 0 : index
    %6 = vector.load %arg3[%c0_4, %c0_5] : memref<8x32xf32, #tpu.memory_space<vmem>>, vector<8x32xf32>
    %c0_6 = arith.constant 0 : index
    %c0_7 = arith.constant 0 : index
    %c0_8 = arith.constant 0 : index
    %7 = vector.load %arg4[%c0_6, %c0_7, %c0_8] : memref<1x8x8xf32, #tpu.memory_space<vmem>>, vector<1x8x8xf32>
    %8 = vector.shape_cast %7 : vector<1x8x8xf32> to vector<8x8xf32>
    %cst_9 = arith.constant 0.000000e+00 : f32
    %9 = vector.broadcast %cst_9 : f32 to vector<8x1xf32>
    %10 = vector.extract_strided_slice %5 {offsets = [0, 0], sizes = [8, 32], strides = [1, 1]} : vector<8x256xf32> to vector<8x32xf32>
    %11 = vector.extract_strided_slice %8 {offsets = [0, 0], sizes = [8, 1], strides = [1, 1]} : vector<8x8xf32> to vector<8x1xf32>
    %12 = arith.mulf %10, %6 : vector<8x32xf32>
    %cst_10 = arith.constant dense<0.000000e+00> : vector<8xf32>
    %13 = vector.multi_reduction <add>, %12, %cst_10 [1] : vector<8x32xf32> to vector<8xf32>
    %14 = vector.shape_cast %13 : vector<8xf32> to vector<8x1xf32>
    %15 = arith.mulf %11, %14 : vector<8x1xf32>
    %16 = arith.addf %9, %15 : vector<8x1xf32>
    %17 = vector.extract_strided_slice %5 {offsets = [0, 32], sizes = [8, 32], strides = [1, 1]} : vector<8x256xf32> to vector<8x32xf32>
    %18 = vector.extract_strided_slice %8 {offsets = [0, 1], sizes = [8, 1], strides = [1, 1]} : vector<8x8xf32> to vector<8x1xf32>
    %19 = arith.mulf %17, %6 : vector<8x32xf32>
    %cst_11 = arith.constant dense<0.000000e+00> : vector<8xf32>
    %20 = vector.multi_reduction <add>, %19, %cst_11 [1] : vector<8x32xf32> to vector<8xf32>
    %21 = vector.shape_cast %20 : vector<8xf32> to vector<8x1xf32>
    %22 = arith.mulf %18, %21 : vector<8x1xf32>
    %23 = arith.addf %16, %22 : vector<8x1xf32>
    %24 = vector.extract_strided_slice %5 {offsets = [0, 64], sizes = [8, 32], strides = [1, 1]} : vector<8x256xf32> to vector<8x32xf32>
    %25 = vector.extract_strided_slice %8 {offsets = [0, 2], sizes = [8, 1], strides = [1, 1]} : vector<8x8xf32> to vector<8x1xf32>
    %26 = arith.mulf %24, %6 : vector<8x32xf32>
    %cst_12 = arith.constant dense<0.000000e+00> : vector<8xf32>
    %27 = vector.multi_reduction <add>, %26, %cst_12 [1] : vector<8x32xf32> to vector<8xf32>
    %28 = vector.shape_cast %27 : vector<8xf32> to vector<8x1xf32>
    %29 = arith.mulf %25, %28 : vector<8x1xf32>
    %30 = arith.addf %23, %29 : vector<8x1xf32>
    %31 = vector.extract_strided_slice %5 {offsets = [0, 96], sizes = [8, 32], strides = [1, 1]} : vector<8x256xf32> to vector<8x32xf32>
    %32 = vector.extract_strided_slice %8 {offsets = [0, 3], sizes = [8, 1], strides = [1, 1]} : vector<8x8xf32> to vector<8x1xf32>
    %33 = arith.mulf %31, %6 : vector<8x32xf32>
    %cst_13 = arith.constant dense<0.000000e+00> : vector<8xf32>
    %34 = vector.multi_reduction <add>, %33, %cst_13 [1] : vector<8x32xf32> to vector<8xf32>
    %35 = vector.shape_cast %34 : vector<8xf32> to vector<8x1xf32>
    %36 = arith.mulf %32, %35 : vector<8x1xf32>
    %37 = arith.addf %30, %36 : vector<8x1xf32>
    %38 = vector.extract_strided_slice %5 {offsets = [0, 128], sizes = [8, 32], strides = [1, 1]} : vector<8x256xf32> to vector<8x32xf32>
    %39 = vector.extract_strided_slice %8 {offsets = [0, 4], sizes = [8, 1], strides = [1, 1]} : vector<8x8xf32> to vector<8x1xf32>
    %40 = arith.mulf %38, %6 : vector<8x32xf32>
    %cst_14 = arith.constant dense<0.000000e+00> : vector<8xf32>
    %41 = vector.multi_reduction <add>, %40, %cst_14 [1] : vector<8x32xf32> to vector<8xf32>
    %42 = vector.shape_cast %41 : vector<8xf32> to vector<8x1xf32>
    %43 = arith.mulf %39, %42 : vector<8x1xf32>
    %44 = arith.addf %37, %43 : vector<8x1xf32>
    %45 = vector.extract_strided_slice %5 {offsets = [0, 160], sizes = [8, 32], strides = [1, 1]} : vector<8x256xf32> to vector<8x32xf32>
    %46 = vector.extract_strided_slice %8 {offsets = [0, 5], sizes = [8, 1], strides = [1, 1]} : vector<8x8xf32> to vector<8x1xf32>
    %47 = arith.mulf %45, %6 : vector<8x32xf32>
    %cst_15 = arith.constant dense<0.000000e+00> : vector<8xf32>
    %48 = vector.multi_reduction <add>, %47, %cst_15 [1] : vector<8x32xf32> to vector<8xf32>
    %49 = vector.shape_cast %48 : vector<8xf32> to vector<8x1xf32>
    %50 = arith.mulf %46, %49 : vector<8x1xf32>
    %51 = arith.addf %44, %50 : vector<8x1xf32>
    %52 = vector.extract_strided_slice %5 {offsets = [0, 192], sizes = [8, 32], strides = [1, 1]} : vector<8x256xf32> to vector<8x32xf32>
    %53 = vector.extract_strided_slice %8 {offsets = [0, 6], sizes = [8, 1], strides = [1, 1]} : vector<8x8xf32> to vector<8x1xf32>
    %54 = arith.mulf %52, %6 : vector<8x32xf32>
    %cst_16 = arith.constant dense<0.000000e+00> : vector<8xf32>
    %55 = vector.multi_reduction <add>, %54, %cst_16 [1] : vector<8x32xf32> to vector<8xf32>
    %56 = vector.shape_cast %55 : vector<8xf32> to vector<8x1xf32>
    %57 = arith.mulf %53, %56 : vector<8x1xf32>
    %58 = arith.addf %51, %57 : vector<8x1xf32>
    %59 = vector.extract_strided_slice %5 {offsets = [0, 224], sizes = [8, 32], strides = [1, 1]} : vector<8x256xf32> to vector<8x32xf32>
    %60 = vector.extract_strided_slice %8 {offsets = [0, 7], sizes = [8, 1], strides = [1, 1]} : vector<8x8xf32> to vector<8x1xf32>
    %61 = arith.mulf %59, %6 : vector<8x32xf32>
    %cst_17 = arith.constant dense<0.000000e+00> : vector<8xf32>
    %62 = vector.multi_reduction <add>, %61, %cst_17 [1] : vector<8x32xf32> to vector<8xf32>
    %63 = vector.shape_cast %62 : vector<8xf32> to vector<8x1xf32>
    %64 = arith.mulf %60, %63 : vector<8x1xf32>
    %65 = arith.addf %58, %64 : vector<8x1xf32>
    %c0_18 = arith.constant 0 : index
    %c0_19 = arith.constant 0 : index
    %66 = vector.load %arg7[%c0_18, %c0_19] : memref<8x1xf32, #tpu.memory_space<vmem>>, vector<8x1xf32>
    %67 = arith.addf %66, %65 : vector<8x1xf32>
    %c0_20 = arith.constant 0 : index
    %c0_21 = arith.constant 0 : index
    %68 = vector.load %arg7[%c0_20, %c0_21] : memref<8x1xf32, #tpu.memory_space<vmem>>, vector<8x1xf32>
    tpu.vector_store %arg7[%c0_20, %c0_21], %67 {strides = array<i32>} : memref<8x1xf32, #tpu.memory_space<vmem>>, vector<8x1xf32>,
    %c3_i32 = arith.constant 3 : i32
    %69 = arith.cmpi eq, %arg1, %c3_i32 : i32
    %70 = arith.extui %69 : i1 to i32
    %c0_i32_22 = arith.constant 0 : i32
    %71 = arith.cmpi ne, %70, %c0_i32_22 : i32
    scf.if %71 {
      %c0_23 = arith.constant 0 : index
      %c0_24 = arith.constant 0 : index
      %72 = vector.load %arg7[%c0_23, %c0_24] : memref<8x1xf32, #tpu.memory_space<vmem>>, vector<8x1xf32>
      %c0_25 = arith.constant 0 : index
      %c0_26 = arith.constant 0 : index
      %73 = vector.load %arg6[%c0_25, %c0_26] : memref<8x1xf32, #tpu.memory_space<vmem>>, vector<8x1xf32>
      tpu.vector_store %arg6[%c0_25, %c0_26], %72 {strides = array<i32>} : memref<8x1xf32, #tpu.memory_space<vmem>>, vector<8x1xf32>,
    } else {
    }
    return
  }
  func.func @transform_0(%arg0: i32, %arg1: i32) -> (i32, i32) {
    %c0_i32 = arith.constant 0 : i32
    %c0_i32_0 = arith.constant 0 : i32
    return %arg0, %c0_i32 : i32, i32
  }
  func.func @transform_1(%arg0: i32, %arg1: i32) -> (i32, i32) {
    %c0_i32 = arith.constant 0 : i32
    %c0_i32_0 = arith.constant 0 : i32
    return %arg0, %c0_i32 : i32, i32
  }
  func.func @transform_2(%arg0: i32, %arg1: i32) -> (i32, i32, i32) {
    %c0_i32 = arith.constant 0 : i32
    %c0_i32_0 = arith.constant 0 : i32
    return %arg1, %arg0, %c0_i32 : i32, i32, i32
  }
  func.func @transform_3(%arg0: i32, %arg1: i32) -> (i32, i32) {
    %c0_i32 = arith.constant 0 : i32
    %c0_i32_0 = arith.constant 0 : i32
    return %c0_i32, %arg1 : i32, i32
  }
  func.func @transform_4(%arg0: i32, %arg1: i32) -> (i32, i32) {
    %c0_i32 = arith.constant 0 : i32
    %c0_i32_0 = arith.constant 0 : i32
    return %arg0, %c0_i32 : i32, i32
  }
}

</mosaic_0001>

<llo_original>
// kernel: tpu_custom_call.1
$region0: #{tpu_custom_call.1}
  #allocation0 [shape = 'u32[]', space=smem, size = 0x4, offset = 0x4, fixed_abs, tag = 'smem constant byte address 0x4 - core index']
  #allocation1 [shape = 'u32[144,128]{1,0:T(1,128)}', space=vmem, size = 0x12000, scoped, tag = 'internal scratch']
  #allocation2 [shape = 'f32[8,1]{1,0:T(8,128)}', space=vmem, size = 0x1000, scoped, tag = 'scratch operand']
  %s0 = inlined_call_operand.hbm [shape: f32[8,32], index: 0, kind: input, shape index: {}]
  %s1 = inlined_call_operand.hbm [shape: f32[8,32], index: 1, kind: input, shape index: {}]
  %s2 = inlined_call_operand.hbm [shape: f32[4,8,8], index: 2, kind: input, shape index: {}]
  %s3 = inlined_call_operand.hbm [shape: f32[32,1024], index: 3, kind: input, shape index: {}]
  %s4 = inlined_call_operand.hbm [shape: f32[8,1], index: 4, kind: output, shape index: {}]
  %s5 = sld [smem:[#allocation0]]
  $region73: #{tpu_custom_call.1} parent=0
    _
  %s7 = ssub.s32 1, %s5
  %s8 = scalar_select 0, %s7, %s5
  $region1: #{tpu_custom_call.1} parent=0
    #allocation3 [shape = 'u8[4096]{0}', space=vmem, size = 0x1000, scoped, tag = 'input window, operand 0, single buffered']
    #allocation4 [shape = 's32[2]{0}', space=sflag, size = 0x8, scoped, tag = 'scoped memory for tpu_custom_call.1']
    #allocation5 [shape = 's32[2]{0}', space=sflag, size = 0x8, scoped, tag = 'scoped memory for tpu_custom_call.1']
    #allocation6 [shape = 'u8[4096]{0}', space=vmem, size = 0x1000, scoped, tag = 'input window, operand 1, single buffered']
    #allocation7 [shape = 's32[1]{0}', space=sflag, size = 0x4, scoped, tag = 'scoped memory for tpu_custom_call.1']
    #allocation8 [shape = 'u8[8192]{0}', space=vmem, size = 0x2000, scoped, tag = 'input window, operand 2']
    #allocation9 [shape = 'u8[65536]{0}', space=vmem, size = 0x10000, scoped, tag = 'input window, operand 3']
    #allocation10 [shape = 'u8[4096]{0}', space=vmem, size = 0x1000, scoped, tag = 'output window, operand 0, single buffered']
    %9 = vsyncpa [#allocation4], 0
    %10 = vsyncpa [#allocation7], 0
    %11 = vsyncpa [#allocation5], 0
    loop: start=0, step=1, limit=6
    $region2: #{tpu_custom_call.1} parent=1 // loop_pre_header
      _
    $region3: #{tpu_custom_call.1} parent=1 // loop_header
      %s13 = sphi 0, %s17
      %p14 = scmp.ge.s32.totalorder %s13, 6
      %s20 = sphi 0, %s32
      %s21 = sphi 0, %s28
      %s22 = sphi 0, %s20
      %s23 = sphi 0, %s21
      %s24 = sphi 0, %s22
      %s25 = sphi 0, %s23
      %s35 = sphi 0, %s37
      %s38 = sphi 0, %s35
      %s39 = sphi 0, %s38
      %s55 = sphi 0, %s39
      %s61 = sphi 0, %s63
      %s64 = sphi 0, %s61
      %s65 = sphi 0, %s64
      %s81 = sphi 0, %s65
      %s89 = sphi 0, %s91
      %s92 = sphi 0, %s89
      %s93 = sphi 0, %s92
      %s109 = sphi 0, %s93
      %s115 = sphi 0, %s117
      %s118 = sphi 0, %s115
      %s119 = sphi 0, %s118
      %s135 = sphi 0, %s119
      %s141 = sphi 0, %s143
      %s144 = sphi 0, %s141
      %s145 = sphi 0, %s144
      %s161 = sphi 0, %s145
    $region4: #{tpu_custom_call.1} parent=1 // loop_header_branch
      %16 = sbr.rel (%p14) target = $region8
    $region5: #{tpu_custom_call.1} parent=1 // loop_body
      %s18 = ssub.s32 %s13, 1
      %s19 = ssub.s32 %s13, 2
      %s26 = sadd.s32 1, %s21
      %p27 = scmp.ge.s32.totalorder %s26, 4
      %s28 = scalar_select %p27, 0, %s26
      %s29 = sadd.s32 1, %s20
      %s30 = scalar_select %p27, %s29, %s20
      %p31 = scmp.ge.s32.totalorder %s30, 1
      %s32 = scalar_select %p31, 0, %s30
      %s33 = ssub.s32 %s20, %s32
      %p34 = scmp.eq.s32.totalorder %s33, 0
      %s36 = sadd.s32 %s35, 1
      %s37 = scalar_select %p34, %s35, %s36
      %p40 = pneg %p34
      %p41 = scmp.eq.s32.totalorder %s13, 3
      %p42 = por %p40, %p41
      %p43 = scmp.ne.s32.totalorder %s35, %s38
      %p44 = scmp.eq.s32.totalorder %s13, 0
      %p45 = por %p43, %p44
      %p46 = scmp.ne.s32.totalorder %s35, %s38
      %p47 = scmp.eq.s32.totalorder %s18, 3
      %p48 = por %p46, %p47
      %p49 = scmp.ne.s32.totalorder %s38, %s39
      %p50 = scmp.eq.s32.totalorder %s18, 0
      %p51 = por %p49, %p50
      %p52 = scmp.ne.s32.totalorder %s38, %s39
      %p53 = scmp.eq.s32.totalorder %s19, 3
      %p54 = por %p52, %p53
      %p56 = scmp.ne.s32.totalorder %s39, %s55
      %p57 = scmp.eq.s32.totalorder %s19, 0
      %p58 = por %p56, %p57
      %s59 = ssub.s32 %s20, %s32
      %p60 = scmp.eq.s32.totalorder %s59, 0
      %s62 = sadd.s32 %s61, 1
      %s63 = scalar_select %p60, %s61, %s62
      %p66 = pneg %p60
      %p67 = scmp.eq.s32.totalorder %s13, 3
      %p68 = por %p66, %p67
      %p69 = scmp.ne.s32.totalorder %s61, %s64
      %p70 = scmp.eq.s32.totalorder %s13, 0
      %p71 = por %p69, %p70
      %p72 = scmp.ne.s32.totalorder %s61, %s64
      %p73 = scmp.eq.s32.totalorder %s18, 3
      %p74 = por %p72, %p73
      %p75 = scmp.ne.s32.totalorder %s64, %s65
      %p76 = scmp.eq.s32.totalorder %s18, 0
      %p77 = por %p75, %p76
      %p78 = scmp.ne.s32.totalorder %s64, %s65
      %p79 = scmp.eq.s32.totalorder %s19, 3
      %p80 = por %p78, %p79
      %p82 = scmp.ne.s32.totalorder %s65, %s81
      %p83 = scmp.eq.s32.totalorder %s19, 0
      %p84 = por %p82, %p83
      %s85 = ssub.s32 %s21, %s28
      %s86 = ssub.s32 %s20, %s32
      %s87 = sor.u32 %s85, %s86
      %p88 = scmp.eq.s32.totalorder %s87, 0
      %s90 = sadd.s32 %s89, 1
      %s91 = scalar_select %p88, %s89, %s90
      %p94 = pneg %p88
      %p95 = scmp.eq.s32.totalorder %s13, 3
      %p96 = por %p94, %p95
      %p97 = scmp.ne.s32.totalorder %s89, %s92
      %p98 = scmp.eq.s32.totalorder %s13, 0
      %p99 = por %p97, %p98
      %p100 = scmp.ne.s32.totalorder %s89, %s92
      %p101 = scmp.eq.s32.totalorder %s18, 3
      %p102 = por %p100, %p101
      %p103 = scmp.ne.s32.totalorder %s92, %s93
      %p104 = scmp.eq.s32.totalorder %s18, 0
      %p105 = por %p103, %p104
      %p106 = scmp.ne.s32.totalorder %s92, %s93
      %p107 = scmp.eq.s32.totalorder %s19, 3
      %p108 = por %p106, %p107
      %p110 = scmp.ne.s32.totalorder %s93, %s109
      %p111 = scmp.eq.s32.totalorder %s19, 0
      %p112 = por %p110, %p111
      %s113 = ssub.s32 %s21, %s28
      %p114 = scmp.eq.s32.totalorder %s113, 0
      %s116 = sadd.s32 %s115, 1
      %s117 = scalar_select %p114, %s115, %s116
      %p120 = pneg %p114
      %p121 = scmp.eq.s32.totalorder %s13, 3
      %p122 = por %p120, %p121
      %p123 = scmp.ne.s32.totalorder %s115, %s118
      %p124 = scmp.eq.s32.totalorder %s13, 0
      %p125 = por %p123, %p124
      %p126 = scmp.ne.s32.totalorder %s115, %s118
      %p127 = scmp.eq.s32.totalorder %s18, 3
      %p128 = por %p126, %p127
      %p129 = scmp.ne.s32.totalorder %s118, %s119
      %p130 = scmp.eq.s32.totalorder %s18, 0
      %p131 = por %p129, %p130
      %p132 = scmp.ne.s32.totalorder %s118, %s119
      %p133 = scmp.eq.s32.totalorder %s19, 3
      %p134 = por %p132, %p133
      %p136 = scmp.ne.s32.totalorder %s119, %s135
      %p137 = scmp.eq.s32.totalorder %s19, 0
      %p138 = por %p136, %p137
      %s139 = ssub.s32 %s20, %s32
      %p140 = scmp.eq.s32.totalorder %s139, 0
      %s142 = sadd.s32 %s141, 1
      %s143 = scalar_select %p140, %s141, %s142
      %p146 = pneg %p140
      %p147 = scmp.eq.s32.totalorder %s13, 3
      %p148 = por %p146, %p147
      %p149 = scmp.ne.s32.totalorder %s141, %s144
      %p150 = scmp.eq.s32.totalorder %s13, 0
      %p151 = por %p149, %p150
      %p152 = scmp.ne.s32.totalorder %s141, %s144
      %p153 = scmp.eq.s32.totalorder %s18, 3
      %p154 = por %p152, %p153
      %p155 = scmp.ne.s32.totalorder %s144, %s145
      %p156 = scmp.eq.s32.totalorder %s18, 0
      %p157 = por %p155, %p156
      %p158 = scmp.ne.s32.totalorder %s144, %s145
      %p159 = scmp.eq.s32.totalorder %s19, 3
      %p160 = por %p158, %p159
      %p162 = scmp.ne.s32.totalorder %s145, %s161
      %p163 = scmp.eq.s32.totalorder %s19, 0
      %p164 = por %p162, %p163
      %p165 = scmp.le.s32.totalorder 1, %s13
      %p166 = scmp.lt.s32.totalorder %s13, 5
      %p167 = pnand %p165, %p166
      %p168 = pneg %p167
      // Predicated region
      $region9: #{tpu_custom_call.1} parent=5 // pred_check
        _
      $region10: #{tpu_custom_call.1} parent=5 // pred_check_branch
        %170 = sbr.rel (%p167) target = $region12
      $region11: #{tpu_custom_call.1} parent=5 // pred_region
        %s171 = ssub.s32 %s13, 1
        // Predicated region
        $region13: #{tpu_custom_call.1} parent=11 // pred_check
          %p172 = pneg %p51
        $region14: #{tpu_custom_call.1} parent=11 // pred_check_branch
          %174 = sbr.rel (%p172) target = $region16
        $region15: #{tpu_custom_call.1} parent=11 // pred_region
          %s176 = ssub.s32 128, 128
          %177 = vsyncadd [#allocation4], %s176
          %s178 = smul.addr %s22, 128
          %s179 = scalar_lea.hbm %s0, %s178
          %s181 = sshll.u32 [#allocation3], 4
          %s182 = int_to_ptr.vmem [resolvable:$true] %s181
          %184 = dma.hbm_to_vmem [thread:$0]  %s179, 128, %s182, [#allocation4]
        $region16: #{tpu_custom_call.1} parent=11 // pred_fallthru
          _
        // Predicated region
        $region17: #{tpu_custom_call.1} parent=11 // pred_check
          %p185 = pneg %p77
        $region18: #{tpu_custom_call.1} parent=11 // pred_check_branch
          %187 = sbr.rel (%p185) target = $region20
        $region19: #{tpu_custom_call.1} parent=11 // pred_region
          %s189 = ssub.s32 128, 128
          %190 = vsyncadd [#allocation7], %s189
          %s191 = smul.addr %s22, 128
          %s192 = scalar_lea.hbm %s1, %s191
          %s194 = sshll.u32 [#allocation6], 4
          %s195 = int_to_ptr.vmem [resolvable:$true] %s194
          %197 = dma.hbm_to_vmem [thread:$0]  %s192, 128, %s195, [#allocation7]
        $region20: #{tpu_custom_call.1} parent=11 // pred_fallthru
          _
      $region12: #{tpu_custom_call.1} parent=5 // pred_fallthru
        _
      %p198 = scmp.lt.s32.totalorder %s13, 4
      // Predicated region
      $region21: #{tpu_custom_call.1} parent=5 // pred_check
        %p199 = pneg %p198
      $region22: #{tpu_custom_call.1} parent=5 // pred_check_branch
        %201 = sbr.rel (%p199) target = $region24
      $region23: #{tpu_custom_call.1} parent=5 // pred_region
        // Predicated region
        $region25: #{tpu_custom_call.1} parent=23 // pred_check
          %p202 = pneg %p99
        $region26: #{tpu_custom_call.1} parent=23 // pred_check_branch
          %204 = sbr.rel (%p202) target = $region28
        $region27: #{tpu_custom_call.1} parent=23 // pred_region
          %s205 = sand.u32 %s13, 1
          %s206 = scalar_lea.sflag [#allocation4], %s205
          %s207 = sand.u32 %s89, 1
          %s208 = smul.addr %s207, 8
          %s209 = scalar_lea.vmem [#allocation8], %s208
          %s211 = ssub.s32 128, 128
          %212 = vsyncadd %s206, %s211
          %s213 = sadd.s32 %s20, %s21
          %s214 = smul.addr %s213, 128
          %s215 = scalar_lea.hbm %s2, %s214
          %s217 = sshll.u32 %s209, 4
          %s218 = int_to_ptr.vmem [resolvable:$true] %s217
          %220 = dma.hbm_to_vmem [thread:$0]  %s215, 128, %s218, %s206
        $region28: #{tpu_custom_call.1} parent=23 // pred_fallthru
          _
        // Predicated region
        $region29: #{tpu_custom_call.1} parent=23 // pred_check
          %p221 = pneg %p125
        $region30: #{tpu_custom_call.1} parent=23 // pred_check_branch
          %223 = sbr.rel (%p221) target = $region32
        $region31: #{tpu_custom_call.1} parent=23 // pred_region
          %s224 = sand.u32 %s13, 1
          %s225 = scalar_lea.sflag [#allocation4], %s224
          %s226 = sand.u32 %s115, 1
          %s227 = smul.addr %s226, 64
          %s228 = scalar_lea.vmem [#allocation9], %s227
          %s229 = smul.u32 2, %s21
          %s231 = ssub.s32 1024, 1024
          %232 = vsyncadd %s225, %s231
          %s233 = smul.addr %s229, 128
          %s234 = scalar_lea.hbm %s3, %s233
          %s235 = sshll.u32 %s228, 4
          %s236 = int_to_ptr.vmem [resolvable:$true] %s235
          %241 = dma.hbm_to_vmem [thread:$0]  %s234, 1024, %s236, %s225, 1024, 256, 16
        $region32: #{tpu_custom_call.1} parent=23 // pred_fallthru
          _
      $region24: #{tpu_custom_call.1} parent=5 // pred_fallthru
        _
      %p242 = scmp.le.s32.totalorder 1, %s13
      %p243 = scmp.lt.s32.totalorder %s13, 5
      %p244 = pnand %p242, %p243
      %p245 = pneg %p244
      // Predicated region
      $region33: #{tpu_custom_call.1} parent=5 // pred_check
        _
      $region34: #{tpu_custom_call.1} parent=5 // pred_check_branch
        %247 = sbr.rel (%p244) target = $region36
      $region35: #{tpu_custom_call.1} parent=5 // pred_region
        %s248 = ssub.s32 %s13, 1
        // Predicated region
        $region37: #{tpu_custom_call.1} parent=35 // pred_check
          %p249 = pneg %p51
        $region38: #{tpu_custom_call.1} parent=35 // pred_check_branch
          %251 = sbr.rel (%p249) target = $region40
        $region39: #{tpu_custom_call.1} parent=35 // pred_region
          %252 = dma.done [#allocation4], 128
        $region40: #{tpu_custom_call.1} parent=35 // pred_fallthru
          _
        // Predicated region
        $region41: #{tpu_custom_call.1} parent=35 // pred_check
          %p253 = pneg %p77
        $region42: #{tpu_custom_call.1} parent=35 // pred_check_branch
          %255 = sbr.rel (%p253) target = $region44
        $region43: #{tpu_custom_call.1} parent=35 // pred_region
          %256 = dma.done [#allocation7], 128
        $region44: #{tpu_custom_call.1} parent=35 // pred_fallthru
          _
        %s257 = sand.u32 %s18, 1
        %s258 = scalar_lea.sflag [#allocation4], %s257
        %s259 = sand.u32 %s92, 1
        %s260 = smul.addr %s259, 8
        %s261 = scalar_lea.vmem [#allocation8], %s260
        // Predicated region
        $region45: #{tpu_custom_call.1} parent=35 // pred_check
          %p262 = pneg %p105
        $region46: #{tpu_custom_call.1} parent=35 // pred_check_branch
          %264 = sbr.rel (%p262) target = $region48
        $region47: #{tpu_custom_call.1} parent=35 // pred_region
          %265 = dma.done %s258, 128
        $region48: #{tpu_custom_call.1} parent=35 // pred_fallthru
          _
        %s266 = sand.u32 %s18, 1
        %s267 = scalar_lea.sflag [#allocation4], %s266
        %s268 = sand.u32 %s118, 1
        %s269 = smul.addr %s268, 64
        %s270 = scalar_lea.vmem [#allocation9], %s269
        // Predicated region
        $region49: #{tpu_custom_call.1} parent=35 // pred_check
          %p271 = pneg %p131
        $region50: #{tpu_custom_call.1} parent=35 // pred_check_branch
          %273 = sbr.rel (%p271) target = $region52
        $region51: #{tpu_custom_call.1} parent=35 // pred_region
          %274 = dma.done %s267, 1024
        $region52: #{tpu_custom_call.1} parent=35 // pred_fallthru
          _
        %p275 = pneg %p51
        %p276 = pneg %p48
        %p277 = pneg %p77
        %p278 = pneg %p74
        %s279 = sand.u32 %s18, 1
        %s280 = scalar_lea.sflag [#allocation4], %s279
        %s281 = sand.u32 %s92, 1
        %s282 = smul.addr %s281, 8
        %s283 = scalar_lea.vmem [#allocation8], %s282
        %p284 = pneg %p105
        %p285 = pneg %p102
        %s286 = sand.u32 %s18, 1
        %s287 = scalar_lea.sflag [#allocation4], %s286
        %s288 = sand.u32 %s118, 1
        %s289 = smul.addr %s288, 64
        %s290 = scalar_lea.vmem [#allocation9], %s289
        %p291 = pneg %p131
        %p292 = pneg %p128
        %p293 = pneg %p157
        %p294 = pneg %p154
        %s295 = smul.u32 2, %s23
        %p296 = scmp.eq.s32.totalorder %s23, 0
        // Predicated region
        $region53: #{tpu_custom_call.1} parent=35 // pred_check
          %p297 = pneg %p296
        $region54: #{tpu_custom_call.1} parent=35 // pred_check_branch
          %299 = sbr.rel (%p297) target = $region56
        $region55: #{tpu_custom_call.1} parent=35 // pred_region
          %vm300 = vcmask 7168
          %301 = vst.msk [vmem:[#allocation2] sm:$0xff] %vm300, 0.0
        $region56: #{tpu_custom_call.1} parent=35 // pred_fallthru
          _
        %v302 = vld [vmem:[#allocation3] sm:$0xff]
        %v303 = vld [vmem:[%s270] sm:$0xff]
        %v304 = vld [vmem:[%s270 + $0x8] sm:$0xff]
        %v305 = vld [vmem:[%s270 + $0x10] sm:$0xff]
        %v306 = vld [vmem:[%s270 + $0x18] sm:$0xff]
        %v307 = vld [vmem:[%s270 + $0x20] sm:$0xff]
        %v308 = vld [vmem:[%s270 + $0x28] sm:$0xff]
        %v309 = vld [vmem:[%s270 + $0x30] sm:$0xff]
        %v310 = vld [vmem:[%s270 + $0x38] sm:$0xff]
        %vm311 = vcmask 261120
        %v313 = vsel %vm311, %v302, 0
        %315 = vmatprep.subr.mxu0 %v304
        %316 = vmatpush1.msra.mxu0 %v303
        %317 = vmatprep.subr.mxu0 %v306
        %318 = vmatpush1.msra.mxu0 %v305
        %319 = vmatprep.subr.mxu0 %v308
        %320 = vmatpush1.msra.mxu0 %v307
        %321 = vmatprep.subr.mxu0 %v310
        %322 = vmatpush1.msra.mxu0 %v309
        %323 = vmatprep.subr.mxu0 0.0
        %324 = vmatpush1.msra.mxu0 0.0
        %325 = vmatprep.subr.mxu0 0.0
        %326 = vmatpush1.msra.mxu0 0.0
        %327 = vmatprep.subr.mxu0 0.0
        %328 = vmatpush1.msra.mxu0 0.0
        %329 = vmatprep.subr.mxu0 0.0
        %330 = vmatpush1.msra.mxu0 0.0
        %331 = vmatprep.subr.mxu0 0.0
        %332 = vmatpush1.msra.mxu0 0.0
        %333 = vmatprep.subr.mxu0 0.0
        %334 = vmatpush1.msra.mxu0 0.0
        %335 = vmatprep.subr.mxu0 0.0
        %336 = vmatpush1.msra.mxu0 0.0
        %337 = vmatprep.subr.mxu0 0.0
        %338 = vmatpush1.msra.mxu0 0.0
        %339 = vmatprep.subr.mxu0 0.0
        %340 = vmatpush1.msra.mxu0 0.0
        %341 = vmatprep.subr.mxu0 0.0
        %342 = vmatpush1.msra.mxu0 0.0
        %343 = vmatprep.subr.mxu0 0.0
        %344 = vmatpush1.msra.mxu0 0.0
        %345 = vmatprep.subr.mxu0 0.0
        %346 = vmatpush1.msra.mxu0 0.0
        %347 = vmatprep.subr.mxu0 0.0
        %348 = vmatpush1.msra.mxu0 0.0
        %349 = vmatprep.subr.mxu0 0.0
        %350 = vmatpush1.msra.mxu0 0.0
        %351 = vmatprep.subr.mxu0 0.0
        %352 = vmatpush1.msra.mxu0 0.0
        %353 = vmatprep.subr.mxu0 0.0
        %354 = vmatpush1.msra.mxu0 0.0
        %355 = vmatprep.subr.mxu0 0.0
        %356 = vmatpush1.msra.mxu0 0.0
        %357 = vmatprep.subr.mxu0 0.0
        %358 = vmatpush1.msra.mxu0 0.0
        %359 = vmatprep.subr.mxu0 0.0
        %360 = vmatpush1.msra.mxu0 0.0
        %361 = vmatprep.subr.mxu0 0.0
        %362 = vmatpush1.msra.mxu0 0.0
        %363 = vmatprep.subr.mxu0 0.0
        %364 = vmatpush1.msra.mxu0 0.0
        %365 = vmatprep.subr.mxu0 0.0
        %366 = vmatpush1.msra.mxu0 0.0
        %367 = vmatprep.subr.mxu0 0.0
        %368 = vmatpush1.msra.mxu0 0.0
        %369 = vmatprep.subr.mxu0 0.0
        %370 = vmatpush1.msra.mxu0 0.0
        %371 = vmatprep.subr.mxu0 0.0
        %372 = vmatpush1.msra.mxu0 0.0
        %373 = vmatprep.subr.mxu0 0.0
        %374 = vmatpush1.msra.mxu0 0.0
        %375 = vmatprep.subr.mxu0 0.0
        %376 = vmatpush1.msra.mxu0 0.0
        %377 = vmatprep.subr.mxu0 0.0
        %378 = vmatpush1.msra.mxu0 0.0
        %379 = vmatprep.mubr.f32.mxu0 0.0
        %380 = vmatmul.mubr.f32.gmra.mrb[0].mxu0 %v313
        %v381 = vpop.f32.mrb[0].mxu0
        %v382 = vadd.f32 0.0, %v381
        %v383 = vpop.f32.mrb[0].mxu0
        %v384 = vadd.f32 0.0, %v383
        %385 = vdwg.mxu0
        %v386 = vld [vmem:[#allocation6] sm:$0xff]
        %v387 = vld [vmem:[%s261] sm:$0xff]
        %v388 = vmul.f32 %v382, %v386
        %v389 = vsel %vm311, %v388, 0.0
        %390 = vadd.xlane.f32.xlu0 %v389
        %v391 = vpop.xlane.xlu0 %390
        %v392 = vmul.f32 %v387, %v391
        %v393 = vadd.f32 %v392, 0.0
        %395 = vrot.lane.b32.xlu0 %v386, 32
        %v396 = vpop.permute.xlu0 %395
        %v398 = vmul.f32 %v382, %v396
        %400 = vrot.lane.b32.xlu0 %v398, 96
        %v401 = vpop.permute.xlu0 %400
        %v403 = vsel %vm311, %v401, 0.0
        %404 = vadd.xlane.f32.xlu0 %v403
        %v405 = vpop.xlane.xlu0 %404
        %v406 = vmul.f32 %v387, %v405
        %408 = vrot.lane.b32.xlu0 %v406, 127
        %v409 = vpop.permute.xlu0 %408
        %v411 = vadd.f32 %v393, %v409
        %412 = vrot.lane.b32.xlu0 %v386, 64
        %v413 = vpop.permute.xlu0 %412
        %v415 = vmul.f32 %v382, %v413
        %417 = vrot.lane.b32.xlu0 %v415, 64
        %v418 = vpop.permute.xlu0 %417
        %v420 = vsel %vm311, %v418, 0.0
        %421 = vadd.xlane.f32.xlu0 %v420
        %v422 = vpop.xlane.xlu0 %421
        %v423 = vmul.f32 %v387, %v422
        %425 = vrot.lane.b32.xlu0 %v423, 126
        %v426 = vpop.permute.xlu0 %425
        %v428 = vadd.f32 %v411, %v426
        %429 = vrot.lane.b32.xlu0 %v386, 96
        %v430 = vpop.permute.xlu0 %429
        %v432 = vmul.f32 %v382, %v430
        %434 = vrot.lane.b32.xlu0 %v432, 32
        %v435 = vpop.permute.xlu0 %434
        %v437 = vsel %vm311, %v435, 0.0
        %438 = vadd.xlane.f32.xlu0 %v437
        %v439 = vpop.xlane.xlu0 %438
        %v440 = vmul.f32 %v387, %v439
        %442 = vrot.lane.b32.xlu0 %v440, 125
        %v443 = vpop.permute.xlu0 %442
        %v445 = vadd.f32 %v428, %v443
        %v446 = vmul.f32 %v384, %v386
        %v447 = vsel %vm311, %v446, 0.0
        %448 = vadd.xlane.f32.xlu0 %v447
        %v449 = vpop.xlane.xlu0 %448
        %v450 = vmul.f32 %v387, %v449
        %452 = vrot.lane.b32.xlu0 %v450, 124
        %v453 = vpop.permute.xlu0 %452
        %v455 = vadd.f32 %v445, %v453
        %v456 = vmul.f32 %v384, %v396
        %458 = vrot.lane.b32.xlu0 %v456, 96
        %v459 = vpop.permute.xlu0 %458
        %v461 = vsel %vm311, %v459, 0.0
        %462 = vadd.xlane.f32.xlu0 %v461
        %v463 = vpop.xlane.xlu0 %462
        %v464 = vmul.f32 %v387, %v463
        %466 = vrot.lane.b32.xlu0 %v464, 123
        %v467 = vpop.permute.xlu0 %466
        %v469 = vadd.f32 %v455, %v467
        %v470 = vmul.f32 %v384, %v413
        %472 = vrot.lane.b32.xlu0 %v470, 64
        %v473 = vpop.permute.xlu0 %472
        %v475 = vsel %vm311, %v473, 0.0
        %476 = vadd.xlane.f32.xlu0 %v475
        %v477 = vpop.xlane.xlu0 %476
        %v478 = vmul.f32 %v387, %v477
        %480 = vrot.lane.b32.xlu0 %v478, 122
        %v481 = vpop.permute.xlu0 %480
        %v483 = vadd.f32 %v469, %v481
        %v484 = vmul.f32 %v384, %v430
        %486 = vrot.lane.b32.xlu0 %v484, 32
        %v487 = vpop.permute.xlu0 %486
        %v489 = vsel %vm311, %v487, 0.0
        %490 = vadd.xlane.f32.xlu0 %v489
        %v491 = vpop.xlane.xlu0 %490
        %v492 = vmul.f32 %v387, %v491
        %494 = vrot.lane.b32.xlu0 %v492, 121
        %v495 = vpop.permute.xlu0 %494
        %v497 = vadd.f32 %v483, %v495
        %v498 = vld [vmem:[#allocation2] sm:$0xff]
        %v499 = vadd.f32 %v498, %v497
        %vm500 = vcmask 7168
        %501 = vst.msk [vmem:[#allocation2] sm:$0xff] %vm500, %v499
        %p502 = scmp.eq.s32.totalorder %s23, 3
        // Predicated region
        $region57: #{tpu_custom_call.1} parent=35 // pred_check
          %p503 = pneg %p502
        $region58: #{tpu_custom_call.1} parent=35 // pred_check_branch
          %505 = sbr.rel (%p503) target = $region60
        $region59: #{tpu_custom_call.1} parent=35 // pred_region
          %v506 = vld [vmem:[#allocation2] sm:$0xff]
          %507 = vst.msk [vmem:[#allocation10] sm:$0xff] %vm500, %v506
        $region60: #{tpu_custom_call.1} parent=35 // pred_fallthru
          _
        // Predicated region
        $region61: #{tpu_custom_call.1} parent=35 // pred_check
          %p508 = pneg %p154
        $region62: #{tpu_custom_call.1} parent=35 // pred_check_branch
          %510 = sbr.rel (%p508) target = $region64
        $region63: #{tpu_custom_call.1} parent=35 // pred_region
          %s512 = ssub.s32 128, 128
          %513 = vsyncadd [#allocation5], %s512
          %s514 = smul.addr %s22, 128
          %s515 = scalar_lea.hbm %s4, %s514
          %s517 = sshll.u32 [#allocation10], 4
          %s518 = int_to_ptr.vmem [resolvable:$true] %s517
          %520 = dma.vmem_to_hbm [thread:$0]  %s518, 128, %s515, [#allocation5]
        $region64: #{tpu_custom_call.1} parent=35 // pred_fallthru
          _
        // Predicated region
        $region65: #{tpu_custom_call.1} parent=35 // pred_check
          %p521 = pneg %p154
        $region66: #{tpu_custom_call.1} parent=35 // pred_check_branch
          %523 = sbr.rel (%p521) target = $region68
        $region67: #{tpu_custom_call.1} parent=35 // pred_region
          %524 = dma.done [#allocation5], 128
        $region68: #{tpu_custom_call.1} parent=35 // pred_fallthru
          _
      $region36: #{tpu_custom_call.1} parent=5 // pred_fallthru
        _
      %p525 = scmp.le.s32.totalorder 2, %s13
      // Predicated region
      $region69: #{tpu_custom_call.1} parent=5 // pred_check
        %p526 = pneg %p525
      $region70: #{tpu_custom_call.1} parent=5 // pred_check_branch
        %528 = sbr.rel (%p526) target = $region72
      $region71: #{tpu_custom_call.1} parent=5 // pred_region
        %s529 = ssub.s32 %s13, 2
      $region72: #{tpu_custom_call.1} parent=5 // pred_fallthru
        _
    $region6: #{tpu_custom_call.1} parent=1 // loop_footer
      %s17 = sadd.s32 1, %s13
    $region7: #{tpu_custom_call.1} parent=1 // loop_footer_branch
      %12 = sbr.rel target = $region3
    $region8: #{tpu_custom_call.1} parent=1 // loop_exit
      _
    %530 = vsyncpa [#allocation4], 1
    %s531 = scalar_lea.sflag [#allocation4], 1
    %532 = vsyncpa %s531, 1
    %533 = vsyncpa [#allocation7], 1
    %534 = vsyncpa [#allocation5], 1
    %s535 = scalar_lea.sflag [#allocation5], 1
    %536 = vsyncpa %s535, 1

</llo_original>
